<compile_context>
chip_gen: v5e
topology: v5e:2x2
jax: 0.10.0
libtpu: 0.0.40
codegen_flags: <defaults>
</compile_context>

<pallas_src>
import numpy as np
import jax
import jax.numpy as jnp
from jax.experimental import pallas as pl
from jax.experimental.pallas import tpu as pltpu

K = 10        # kernel_size (also the nn.Upsample scale factor)
EPS = 1e-5    # BatchNorm eps (PyTorch default), compile-time constant


# ---------------------------------------------------------------------------
# Pallas kernel (built per static shape): the whole DecoderLayer forward, fused.
# ---------------------------------------------------------------------------
def _make_kernel(N, L1, L2, L3, L4, dl, Np, Lbuf):
    """N, L*: true (unpadded) sizes; Np/Lbuf: sublane/lane-padded buffer sizes."""

    def shift(y, s):
        # z[:, t] = y[:, t + s]  via a circular lane rotate.  Wrapped elements either
        # come from the zero tail of the buffer (Lbuf >= L_enc + K + dl margin) or land
        # at lanes >= L_out and are killed by the post-conv mask -- so the circularity
        # never leaks into valid outputs.
        if s == 0:
            return y
        return pltpu.roll(y, shift=(-s) % Lbuf, axis=1)

    def kernel(u_ref, enc_ref, w_ref, out_ref):
        lane = jax.lax.broadcasted_iota(jnp.int32, (Np, Lbuf), 1)
        row = jax.lax.broadcasted_iota(jnp.int32, (Np, Lbuf), 0)
        row_ok = row < N

        def conv(y, w_base, pad):
            # PyTorch Conv1d (cross-correlation): out[t] = sum_k w[k] * y[t + k - pad]
            acc = w_ref[w_base] * shift(y, -pad)
            for k in range(1, K):
                acc = acc + w_ref[w_base + k] * shift(y, k - pad)
            return acc

        def bn(acc, L_out, i):
            # Training-mode BatchNorm1d with C=1: biased batch stats over the valid
            # N*L_out elements.  sum / sumsq are independent reductions; gamma is
            # folded into the rsqrt scale so the normalize+affine is one FMA pass.
            mask = row_ok & (lane < L_out)
            y = jnp.where(mask, acc, 0.0)                     # zero conv garbage lanes
            inv_cnt = 1.0 / float(N * L_out)
            s1 = jnp.sum(y, axis=(0, 1), keepdims=True)
            s2 = jnp.sum(y * y, axis=(0, 1), keepdims=True)
            m = s1 * inv_cnt
            v = s2 * inv_cnt - m * m
            scale = jax.lax.rsqrt(v + EPS) * w_ref[50 + 2 * i]    # gamma folded in
            off = w_ref[51 + 2 * i] - m * scale                   # beta - m*scale
            return jnp.where(mask, y * scale + off, 0.0)          # keep padding at 0

        u = u_ref[...]
        enc = enc_ref[...]

        # conv1 + bn1  (conv biases omitted: training-mode BN cancels them exactly)
        y = bn(conv(u, 0, (K - 1) // 2), L1, 0)
        # conv2 + bn2
        y = bn(conv(y, 10, (K + 1) // 2), L2, 1)
        # F.pad(dl) + channel-concat + conv3 + bn3: the pad is folded into the
        # decoder-path effective padding; the 2-input-channel conv is the sum of
        # the two single-channel tap convolutions.
        y = bn(conv(y, 20, (K - 1) // 2 + dl) + conv(enc, 30, (K - 1) // 2), L3, 2)
        # conv4 + bn4
        out_ref[...] = bn(conv(y, 40, (K + 1) // 2), L4, 3)

    return kernel


# ---------------------------------------------------------------------------
# Wrapper
# ---------------------------------------------------------------------------
def decoder_forward(x, enc, p):
    # x: (N, 1, L_in), enc: (N, 1, L_enc)  (PyTorch NCL)
    x = np.asarray(x, np.float32)
    enc = np.asarray(enc, np.float32)
    N, _, L_in = x.shape
    L_enc = enc.shape[2]
    Lu = L_in * K                              # after Upsample
    L1 = Lu + 2 * ((K - 1) // 2) - K + 1       # after conv1
    L2 = L1 + 2 * ((K + 1) // 2) - K + 1       # after conv2
    diff = L_enc - L2
    assert diff >= 0 and diff % 2 == 0, "same constraint as the PyTorch module"
    dl = diff // 2
    L3 = L_enc + 2 * ((K - 1) // 2) - K + 1    # after conv3
    L4 = L3 + 2 * ((K + 1) // 2) - K + 1       # after conv4
    assert L4 == L_enc

    Np = ((N + 7) // 8) * 8                           # sublane-dense batch
    Lbuf = ((L_enc + K + dl + 127) // 128) * 128      # lane-dense time axis + roll margin

    # nearest-neighbour upsample as broadcast+reshape (essentially free)
    u = np.broadcast_to(x[:, 0, :, None], (N, L_in, K)).reshape(N, Lu)
    u_p = np.zeros((Np, Lbuf), np.float32); u_p[:N, :Lu] = u
    e_p = np.zeros((Np, Lbuf), np.float32); e_p[:N, :L_enc] = enc[:, 0, :]

    # 58 scalars in SMEM: 5 x 10 conv taps + 4 x (gamma, beta).
    # Conv biases are intentionally NOT passed -- training-mode BatchNorm subtracts
    # the batch mean right after each conv, so additive biases cancel exactly.
    # (They would matter again for eval-mode BN with running stats.)
    w = np.zeros((58,), np.float32)
    w[0:10] = np.asarray(p["w1"])[0, 0]
    w[10:20] = np.asarray(p["w2"])[0, 0]
    w[20:30] = np.asarray(p["w3"])[0, 0]   # conv3, decoder-path channel
    w[30:40] = np.asarray(p["w3"])[0, 1]   # conv3, encoder-path channel
    w[40:50] = np.asarray(p["w4"])[0, 0]
    w[50:58] = [p["g1"], p["bt1"], p["g2"], p["bt2"],
                p["g3"], p["bt3"], p["g4"], p["bt4"]]

    kernel = _make_kernel(N, L1, L2, L3, L4, dl, Np, Lbuf)
    out = pl.pallas_call(
        kernel,
        out_shape=jax.ShapeDtypeStruct((Np, Lbuf), jnp.float32),
        in_specs=[pl.BlockSpec(memory_space=pltpu.MemorySpace.VMEM),
                  pl.BlockSpec(memory_space=pltpu.MemorySpace.VMEM),
                  pl.BlockSpec(memory_space=pltpu.MemorySpace.SMEM)],
        out_specs=pl.BlockSpec(memory_space=pltpu.MemorySpace.VMEM),
        compiler_params=pltpu.CompilerParams(
            # tiny resident footprint (3 lane-dense f32 slabs); generous floor
            vmem_limit_bytes=max(32 * Np * Lbuf * 4, 4 << 20)),
    )(jnp.asarray(u_p), jnp.asarray(e_p), jnp.asarray(w))

    return out[:N, None, :L_enc]   # back to (N, 1, L_enc)


# ---------------------------------------------------------------------------
# Pure-numpy reference with exact PyTorch semantics (for validation)
# ---------------------------------------------------------------------------
def ref_forward(x, enc, p):
    def conv1d(x, w, b, pad):
        N, Cin, L = x.shape
        Cout, _, Kk = w.shape
        Lo = L + 2 * pad - Kk + 1
        xp = np.zeros((N, Cin, L + 2 * pad), np.float64)
        xp[:, :, pad:pad + L] = x
        out = np.zeros((N, Cout, Lo), np.float64)
        for t in range(Lo):
            out[:, :, t] = np.einsum("nck,ock->no", xp[:, :, t:t + Kk], w) + b
        return out

    def bn(y, g, b):
        m = y.mean(axis=(0, 2), keepdims=True)
        v = y.var(axis=(0, 2), keepdims=True)   # biased, as in training-mode BN
        return (y - m) / np.sqrt(v + EPS) * g + b

    y = np.repeat(x, K, axis=2)                                 # Upsample (nearest)
    y = bn(conv1d(y, p["w1"], p["b1"], (K - 1) // 2), p["g1"], p["bt1"])
    y = bn(conv1d(y, p["w2"], p["b2"], (K + 1) // 2), p["g2"], p["bt2"])
    diff = enc.shape[2] - y.shape[2]
    y = np.pad(y, ((0, 0), (0, 0), (diff // 2, diff // 2)))
    y = np.concatenate([y, enc], axis=1)
    y = bn(conv1d(y, p["w3"], p["b3"], (K - 1) // 2), p["g3"], p["bt3"])
    y = bn(conv1d(y, p["w4"], p["b4"], (K + 1) // 2), p["g4"], p["bt4"])
    return y


if __name__ == "__main__":
    key = jax.random.PRNGKey(0)
    ks = jax.random.split(key, 10)

    N, L_in = 2, 8
    L_enc = 84   # diff = 84 - 80 = 4 -> exercises the F.pad path

    x = np.asarray(jax.random.normal(ks[0], (N, 1, L_in), jnp.float32))
    enc = np.asarray(jax.random.normal(ks[1], (N, 1, L_enc), jnp.float32))

    def uinit(k, shape, fan_in):
        bound = 1.0 / np.sqrt(fan_in)
        return np.asarray(jax.random.uniform(k, shape, jnp.float32, -bound, bound))

    params = {
        "w1": uinit(ks[2], (1, 1, K), K),     "b1": uinit(ks[3], (1,), K),
        "w2": uinit(ks[4], (1, 1, K), K),     "b2": uinit(ks[5], (1,), K),
        "w3": uinit(ks[6], (1, 2, K), 2 * K), "b3": uinit(ks[7], (1,), 2 * K),
        "w4": uinit(ks[8], (1, 1, K), K),     "b4": uinit(ks[9], (1,), K),
        # BatchNorm affine params at PyTorch defaults (weight=1, bias=0)
        "g1": np.float32(1.0), "bt1": np.float32(0.0),
        "g2": np.float32(1.0), "bt2": np.float32(0.0),
        "g3": np.float32(1.0), "bt3": np.float32(0.0),
        "g4": np.float32(1.0), "bt4": np.float32(0.0),
    }

    out = jax.block_until_ready(decoder_forward(x, enc, params))

    ref = ref_forward(x.astype(np.float64), enc.astype(np.float64),
                      {k: np.asarray(v, np.float64) for k, v in params.items()})
    np.testing.assert_allclose(np.asarray(out), ref, rtol=2e-3, atol=2e-3)
    print("KERNEL_OK")
</pallas_src>

<mosaic_0001>
module attributes {stable_mosaic.version = 11 : i64} {
  func.func @kernel(%arg0: memref<8x128xf32, #tpu.memory_space<vmem>>, %arg1: memref<8x128xf32, #tpu.memory_space<vmem>>, %arg2: memref<58xf32, #tpu.memory_space<smem>>, %arg3: memref<8x128xf32, #tpu.memory_space<vmem>>) attributes {dimension_semantics = [], scalar_prefetch = 0 : i64, scratch_operands = 0 : i64, tpu.core_type = #tpu.core_type<tc>} {
    %0 = tpu.iota {dimensions = array<i32: 1>} : vector<8x128xi32>
    %1 = tpu.iota {dimensions = array<i32: 0>} : vector<8x128xi32>
    %c2_i32 = arith.constant 2 : i32
    %2 = vector.broadcast %c2_i32 : i32 to vector<8x128xi32>
    %3 = arith.cmpi slt, %1, %2 : vector<8x128xi32>
    %c0 = arith.constant 0 : index
    %c0_0 = arith.constant 0 : index
    %4 = vector.load %arg0[%c0, %c0_0] : memref<8x128xf32, #tpu.memory_space<vmem>>, vector<8x128xf32>
    %c0_1 = arith.constant 0 : index
    %c0_2 = arith.constant 0 : index
    %5 = vector.load %arg1[%c0_1, %c0_2] : memref<8x128xf32, #tpu.memory_space<vmem>>, vector<8x128xf32>
    %c0_3 = arith.constant 0 : index
    %6 = memref.load %arg2[%c0_3] : memref<58xf32, #tpu.memory_space<smem>>
    %c4_i32 = arith.constant 4 : i32
    %7 = tpu.dynamic_rotate %4 by %c4_i32 dim 1 : vector<8x128xf32>, i32 -> vector<8x128xf32>
    %8 = vector.broadcast %6 : f32 to vector<8x128xf32>
    %9 = arith.mulf %8, %7 : vector<8x128xf32>
    %c1 = arith.constant 1 : index
    %10 = memref.load %arg2[%c1] : memref<58xf32, #tpu.memory_space<smem>>
    %c3_i32 = arith.constant 3 : i32
    %11 = tpu.dynamic_rotate %4 by %c3_i32 dim 1 : vector<8x128xf32>, i32 -> vector<8x128xf32>
    %12 = vector.broadcast %10 : f32 to vector<8x128xf32>
    %13 = arith.mulf %12, %11 : vector<8x128xf32>
    %14 = arith.addf %9, %13 : vector<8x128xf32>
    %c2 = arith.constant 2 : index
    %15 = memref.load %arg2[%c2] : memref<58xf32, #tpu.memory_space<smem>>
    %c2_i32_4 = arith.constant 2 : i32
    %16 = tpu.dynamic_rotate %4 by %c2_i32_4 dim 1 : vector<8x128xf32>, i32 -> vector<8x128xf32>
    %17 = vector.broadcast %15 : f32 to vector<8x128xf32>
    %18 = arith.mulf %17, %16 : vector<8x128xf32>
    %19 = arith.addf %14, %18 : vector<8x128xf32>
    %c3 = arith.constant 3 : index
    %20 = memref.load %arg2[%c3] : memref<58xf32, #tpu.memory_space<smem>>
    %c1_i32 = arith.constant 1 : i32
    %21 = tpu.dynamic_rotate %4 by %c1_i32 dim 1 : vector<8x128xf32>, i32 -> vector<8x128xf32>
    %22 = vector.broadcast %20 : f32 to vector<8x128xf32>
    %23 = arith.mulf %22, %21 : vector<8x128xf32>
    %24 = arith.addf %19, %23 : vector<8x128xf32>
    %c4 = arith.constant 4 : index
    %25 = memref.load %arg2[%c4] : memref<58xf32, #tpu.memory_space<smem>>
    %26 = vector.broadcast %25 : f32 to vector<8x128xf32>
    %27 = arith.mulf %26, %4 : vector<8x128xf32>
    %28 = arith.addf %24, %27 : vector<8x128xf32>
    %c5 = arith.constant 5 : index
    %29 = memref.load %arg2[%c5] : memref<58xf32, #tpu.memory_space<smem>>
    %c127_i32 = arith.constant 127 : i32
    %30 = tpu.dynamic_rotate %4 by %c127_i32 dim 1 : vector<8x128xf32>, i32 -> vector<8x128xf32>
    %31 = vector.broadcast %29 : f32 to vector<8x128xf32>
    %32 = arith.mulf %31, %30 : vector<8x128xf32>
    %33 = arith.addf %28, %32 : vector<8x128xf32>
    %c6 = arith.constant 6 : index
    %34 = memref.load %arg2[%c6] : memref<58xf32, #tpu.memory_space<smem>>
    %c126_i32 = arith.constant 126 : i32
    %35 = tpu.dynamic_rotate %4 by %c126_i32 dim 1 : vector<8x128xf32>, i32 -> vector<8x128xf32>
    %36 = vector.broadcast %34 : f32 to vector<8x128xf32>
    %37 = arith.mulf %36, %35 : vector<8x128xf32>
    %38 = arith.addf %33, %37 : vector<8x128xf32>
    %c7 = arith.constant 7 : index
    %39 = memref.load %arg2[%c7] : memref<58xf32, #tpu.memory_space<smem>>
    %c125_i32 = arith.constant 125 : i32
    %40 = tpu.dynamic_rotate %4 by %c125_i32 dim 1 : vector<8x128xf32>, i32 -> vector<8x128xf32>
    %41 = vector.broadcast %39 : f32 to vector<8x128xf32>
    %42 = arith.mulf %41, %40 : vector<8x128xf32>
    %43 = arith.addf %38, %42 : vector<8x128xf32>
    %c8 = arith.constant 8 : index
    %44 = memref.load %arg2[%c8] : memref<58xf32, #tpu.memory_space<smem>>
    %c124_i32 = arith.constant 124 : i32
    %45 = tpu.dynamic_rotate %4 by %c124_i32 dim 1 : vector<8x128xf32>, i32 -> vector<8x128xf32>
    %46 = vector.broadcast %44 : f32 to vector<8x128xf32>
    %47 = arith.mulf %46, %45 : vector<8x128xf32>
    %48 = arith.addf %43, %47 : vector<8x128xf32>
    %c9 = arith.constant 9 : index
    %49 = memref.load %arg2[%c9] : memref<58xf32, #tpu.memory_space<smem>>
    %c123_i32 = arith.constant 123 : i32
    %50 = tpu.dynamic_rotate %4 by %c123_i32 dim 1 : vector<8x128xf32>, i32 -> vector<8x128xf32>
    %51 = vector.broadcast %49 : f32 to vector<8x128xf32>
    %52 = arith.mulf %51, %50 : vector<8x128xf32>
    %53 = arith.addf %48, %52 : vector<8x128xf32>
    %c79_i32 = arith.constant 79 : i32
    %54 = vector.broadcast %c79_i32 : i32 to vector<8x128xi32>
    %55 = arith.cmpi slt, %0, %54 : vector<8x128xi32>
    %56 = arith.andi %3, %55 : vector<8x128xi1>
    %cst = arith.constant 0.000000e+00 : f32
    %57 = vector.broadcast %cst : f32 to vector<8x128xf32>
    %58 = arith.select %56, %53, %57 : vector<8x128xi1>, vector<8x128xf32>
    %59 = vector.shape_cast %58 : vector<8x128xf32> to vector<1x8x128xf32>
    %cst_5 = arith.constant dense<0.000000e+00> : vector<1xf32>
    %60 = vector.multi_reduction <add>, %59, %cst_5 [1, 2] : vector<1x8x128xf32> to vector<1xf32>
    %61 = vector.shape_cast %60 : vector<1xf32> to vector<1x1x1xf32>
    %62 = vector.extract %61[0, 0, 0] : f32 from vector<1x1x1xf32>
    %63 = vector.broadcast %62 : f32 to vector<1x1xf32>
    %64 = arith.mulf %58, %58 : vector<8x128xf32>
    %65 = vector.shape_cast %64 : vector<8x128xf32> to vector<1x8x128xf32>
    %cst_6 = arith.constant dense<0.000000e+00> : vector<1xf32>
    %66 = vector.multi_reduction <add>, %65, %cst_6 [1, 2] : vector<1x8x128xf32> to vector<1xf32>
    %67 = vector.shape_cast %66 : vector<1xf32> to vector<1x1x1xf32>
    %68 = vector.extract %67[0, 0, 0] : f32 from vector<1x1x1xf32>
    %69 = vector.broadcast %68 : f32 to vector<1x1xf32>
    %cst_7 = arith.constant 0.00632911408 : f32
    %70 = vector.broadcast %cst_7 : f32 to vector<1x1xf32>
    %71 = arith.mulf %63, %70 : vector<1x1xf32>
    %cst_8 = arith.constant 0.00632911408 : f32
    %72 = vector.broadcast %cst_8 : f32 to vector<1x1xf32>
    %73 = arith.mulf %69, %72 : vector<1x1xf32>
    %74 = arith.mulf %71, %71 : vector<1x1xf32>
    %75 = arith.subf %73, %74 : vector<1x1xf32>
    %cst_9 = arith.constant 9.99999974E-6 : f32
    %76 = vector.broadcast %cst_9 : f32 to vector<1x1xf32>
    %77 = arith.addf %75, %76 : vector<1x1xf32>
    %78 = math.rsqrt %77 : vector<1x1xf32>
    %c50 = arith.constant 50 : index
    %79 = memref.load %arg2[%c50] : memref<58xf32, #tpu.memory_space<smem>>
    %80 = vector.broadcast %79 : f32 to vector<1x1xf32>
    %81 = arith.mulf %78, %80 : vector<1x1xf32>
    %c51 = arith.constant 51 : index
    %82 = memref.load %arg2[%c51] : memref<58xf32, #tpu.memory_space<smem>>
    %83 = arith.mulf %71, %81 : vector<1x1xf32>
    %84 = vector.broadcast %82 : f32 to vector<1x1xf32>
    %85 = arith.subf %84, %83 : vector<1x1xf32>
    %86 = vector.broadcast %81 : vector<1x1xf32> to vector<8x128xf32>
    %87 = arith.mulf %58, %86 : vector<8x128xf32>
    %88 = vector.broadcast %85 : vector<1x1xf32> to vector<8x128xf32>
    %89 = arith.addf %87, %88 : vector<8x128xf32>
    %cst_10 = arith.constant 0.000000e+00 : f32
    %90 = vector.broadcast %cst_10 : f32 to vector<8x128xf32>
    %91 = arith.select %56, %89, %90 : vector<8x128xi1>, vector<8x128xf32>
    %c10 = arith.constant 10 : index
    %92 = memref.load %arg2[%c10] : memref<58xf32, #tpu.memory_space<smem>>
    %c5_i32 = arith.constant 5 : i32
    %93 = tpu.dynamic_rotate %91 by %c5_i32 dim 1 : vector<8x128xf32>, i32 -> vector<8x128xf32>
    %94 = vector.broadcast %92 : f32 to vector<8x128xf32>
    %95 = arith.mulf %94, %93 : vector<8x128xf32>
    %c11 = arith.constant 11 : index
    %96 = memref.load %arg2[%c11] : memref<58xf32, #tpu.memory_space<smem>>
    %c4_i32_11 = arith.constant 4 : i32
    %97 = tpu.dynamic_rotate %91 by %c4_i32_11 dim 1 : vector<8x128xf32>, i32 -> vector<8x128xf32>
    %98 = vector.broadcast %96 : f32 to vector<8x128xf32>
    %99 = arith.mulf %98, %97 : vector<8x128xf32>
    %100 = arith.addf %95, %99 : vector<8x128xf32>
    %c12 = arith.constant 12 : index
    %101 = memref.load %arg2[%c12] : memref<58xf32, #tpu.memory_space<smem>>
    %c3_i32_12 = arith.constant 3 : i32
    %102 = tpu.dynamic_rotate %91 by %c3_i32_12 dim 1 : vector<8x128xf32>, i32 -> vector<8x128xf32>
    %103 = vector.broadcast %101 : f32 to vector<8x128xf32>
    %104 = arith.mulf %103, %102 : vector<8x128xf32>
    %105 = arith.addf %100, %104 : vector<8x128xf32>
    %c13 = arith.constant 13 : index
    %106 = memref.load %arg2[%c13] : memref<58xf32, #tpu.memory_space<smem>>
    %c2_i32_13 = arith.constant 2 : i32
    %107 = tpu.dynamic_rotate %91 by %c2_i32_13 dim 1 : vector<8x128xf32>, i32 -> vector<8x128xf32>
    %108 = vector.broadcast %106 : f32 to vector<8x128xf32>
    %109 = arith.mulf %108, %107 : vector<8x128xf32>
    %110 = arith.addf %105, %109 : vector<8x128xf32>
    %c14 = arith.constant 14 : index
    %111 = memref.load %arg2[%c14] : memref<58xf32, #tpu.memory_space<smem>>
    %c1_i32_14 = arith.constant 1 : i32
    %112 = tpu.dynamic_rotate %91 by %c1_i32_14 dim 1 : vector<8x128xf32>, i32 -> vector<8x128xf32>
    %113 = vector.broadcast %111 : f32 to vector<8x128xf32>
    %114 = arith.mulf %113, %112 : vector<8x128xf32>
    %115 = arith.addf %110, %114 : vector<8x128xf32>
    %c15 = arith.constant 15 : index
    %116 = memref.load %arg2[%c15] : memref<58xf32, #tpu.memory_space<smem>>
    %117 = vector.broadcast %116 : f32 to vector<8x128xf32>
    %118 = arith.mulf %117, %91 : vector<8x128xf32>
    %119 = arith.addf %115, %118 : vector<8x128xf32>
    %c16 = arith.constant 16 : index
    %120 = memref.load %arg2[%c16] : memref<58xf32, #tpu.memory_space<smem>>
    %c127_i32_15 = arith.constant 127 : i32
    %121 = tpu.dynamic_rotate %91 by %c127_i32_15 dim 1 : vector<8x128xf32>, i32 -> vector<8x128xf32>
    %122 = vector.broadcast %120 : f32 to vector<8x128xf32>
    %123 = arith.mulf %122, %121 : vector<8x128xf32>
    %124 = arith.addf %119, %123 : vector<8x128xf32>
    %c17 = arith.constant 17 : index
    %125 = memref.load %arg2[%c17] : memref<58xf32, #tpu.memory_space<smem>>
    %c126_i32_16 = arith.constant 126 : i32
    %126 = tpu.dynamic_rotate %91 by %c126_i32_16 dim 1 : vector<8x128xf32>, i32 -> vector<8x128xf32>
    %127 = vector.broadcast %125 : f32 to vector<8x128xf32>
    %128 = arith.mulf %127, %126 : vector<8x128xf32>
    %129 = arith.addf %124, %128 : vector<8x128xf32>
    %c18 = arith.constant 18 : index
    %130 = memref.load %arg2[%c18] : memref<58xf32, #tpu.memory_space<smem>>
    %c125_i32_17 = arith.constant 125 : i32
    %131 = tpu.dynamic_rotate %91 by %c125_i32_17 dim 1 : vector<8x128xf32>, i32 -> vector<8x128xf32>
    %132 = vector.broadcast %130 : f32 to vector<8x128xf32>
    %133 = arith.mulf %132, %131 : vector<8x128xf32>
    %134 = arith.addf %129, %133 : vector<8x128xf32>
    %c19 = arith.constant 19 : index
    %135 = memref.load %arg2[%c19] : memref<58xf32, #tpu.memory_space<smem>>
    %c124_i32_18 = arith.constant 124 : i32
    %136 = tpu.dynamic_rotate %91 by %c124_i32_18 dim 1 : vector<8x128xf32>, i32 -> vector<8x128xf32>
    %137 = vector.broadcast %135 : f32 to vector<8x128xf32>
    %138 = arith.mulf %137, %136 : vector<8x128xf32>
    %139 = arith.addf %134, %138 : vector<8x128xf32>
    %c80_i32 = arith.constant 80 : i32
    %140 = vector.broadcast %c80_i32 : i32 to vector<8x128xi32>
    %141 = arith.cmpi slt, %0, %140 : vector<8x128xi32>
    %142 = arith.andi %3, %141 : vector<8x128xi1>
    %cst_19 = arith.constant 0.000000e+00 : f32
    %143 = vector.broadcast %cst_19 : f32 to vector<8x128xf32>
    %144 = arith.select %142, %139, %143 : vector<8x128xi1>, vector<8x128xf32>
    %145 = vector.shape_cast %144 : vector<8x128xf32> to vector<1x8x128xf32>
    %cst_20 = arith.constant dense<0.000000e+00> : vector<1xf32>
    %146 = vector.multi_reduction <add>, %145, %cst_20 [1, 2] : vector<1x8x128xf32> to vector<1xf32>
    %147 = vector.shape_cast %146 : vector<1xf32> to vector<1x1x1xf32>
    %148 = vector.extract %147[0, 0, 0] : f32 from vector<1x1x1xf32>
    %149 = vector.broadcast %148 : f32 to vector<1x1xf32>
    %150 = arith.mulf %144, %144 : vector<8x128xf32>
    %151 = vector.shape_cast %150 : vector<8x128xf32> to vector<1x8x128xf32>
    %cst_21 = arith.constant dense<0.000000e+00> : vector<1xf32>
    %152 = vector.multi_reduction <add>, %151, %cst_21 [1, 2] : vector<1x8x128xf32> to vector<1xf32>
    %153 = vector.shape_cast %152 : vector<1xf32> to vector<1x1x1xf32>
    %154 = vector.extract %153[0, 0, 0] : f32 from vector<1x1x1xf32>
    %155 = vector.broadcast %154 : f32 to vector<1x1xf32>
    %cst_22 = arith.constant 6.250000e-03 : f32
    %156 = vector.broadcast %cst_22 : f32 to vector<1x1xf32>
    %157 = arith.mulf %149, %156 : vector<1x1xf32>
    %cst_23 = arith.constant 6.250000e-03 : f32
    %158 = vector.broadcast %cst_23 : f32 to vector<1x1xf32>
    %159 = arith.mulf %155, %158 : vector<1x1xf32>
    %160 = arith.mulf %157, %157 : vector<1x1xf32>
    %161 = arith.subf %159, %160 : vector<1x1xf32>
    %cst_24 = arith.constant 9.99999974E-6 : f32
    %162 = vector.broadcast %cst_24 : f32 to vector<1x1xf32>
    %163 = arith.addf %161, %162 : vector<1x1xf32>
    %164 = math.rsqrt %163 : vector<1x1xf32>
    %c52 = arith.constant 52 : index
    %165 = memref.load %arg2[%c52] : memref<58xf32, #tpu.memory_space<smem>>
    %166 = vector.broadcast %165 : f32 to vector<1x1xf32>
    %167 = arith.mulf %164, %166 : vector<1x1xf32>
    %c53 = arith.constant 53 : index
    %168 = memref.load %arg2[%c53] : memref<58xf32, #tpu.memory_space<smem>>
    %169 = arith.mulf %157, %167 : vector<1x1xf32>
    %170 = vector.broadcast %168 : f32 to vector<1x1xf32>
    %171 = arith.subf %170, %169 : vector<1x1xf32>
    %172 = vector.broadcast %167 : vector<1x1xf32> to vector<8x128xf32>
    %173 = arith.mulf %144, %172 : vector<8x128xf32>
    %174 = vector.broadcast %171 : vector<1x1xf32> to vector<8x128xf32>
    %175 = arith.addf %173, %174 : vector<8x128xf32>
    %cst_25 = arith.constant 0.000000e+00 : f32
    %176 = vector.broadcast %cst_25 : f32 to vector<8x128xf32>
    %177 = arith.select %142, %175, %176 : vector<8x128xi1>, vector<8x128xf32>
    %c20 = arith.constant 20 : index
    %178 = memref.load %arg2[%c20] : memref<58xf32, #tpu.memory_space<smem>>
    %c6_i32 = arith.constant 6 : i32
    %179 = tpu.dynamic_rotate %177 by %c6_i32 dim 1 : vector<8x128xf32>, i32 -> vector<8x128xf32>
    %180 = vector.broadcast %178 : f32 to vector<8x128xf32>
    %181 = arith.mulf %180, %179 : vector<8x128xf32>
    %c21 = arith.constant 21 : index
    %182 = memref.load %arg2[%c21] : memref<58xf32, #tpu.memory_space<smem>>
    %c5_i32_26 = arith.constant 5 : i32
    %183 = tpu.dynamic_rotate %177 by %c5_i32_26 dim 1 : vector<8x128xf32>, i32 -> vector<8x128xf32>
    %184 = vector.broadcast %182 : f32 to vector<8x128xf32>
    %185 = arith.mulf %184, %183 : vector<8x128xf32>
    %186 = arith.addf %181, %185 : vector<8x128xf32>
    %c22 = arith.constant 22 : index
    %187 = memref.load %arg2[%c22] : memref<58xf32, #tpu.memory_space<smem>>
    %c4_i32_27 = arith.constant 4 : i32
    %188 = tpu.dynamic_rotate %177 by %c4_i32_27 dim 1 : vector<8x128xf32>, i32 -> vector<8x128xf32>
    %189 = vector.broadcast %187 : f32 to vector<8x128xf32>
    %190 = arith.mulf %189, %188 : vector<8x128xf32>
    %191 = arith.addf %186, %190 : vector<8x128xf32>
    %c23 = arith.constant 23 : index
    %192 = memref.load %arg2[%c23] : memref<58xf32, #tpu.memory_space<smem>>
    %c3_i32_28 = arith.constant 3 : i32
    %193 = tpu.dynamic_rotate %177 by %c3_i32_28 dim 1 : vector<8x128xf32>, i32 -> vector<8x128xf32>
    %194 = vector.broadcast %192 : f32 to vector<8x128xf32>
    %195 = arith.mulf %194, %193 : vector<8x128xf32>
    %196 = arith.addf %191, %195 : vector<8x128xf32>
    %c24 = arith.constant 24 : index
    %197 = memref.load %arg2[%c24] : memref<58xf32, #tpu.memory_space<smem>>
    %c2_i32_29 = arith.constant 2 : i32
    %198 = tpu.dynamic_rotate %177 by %c2_i32_29 dim 1 : vector<8x128xf32>, i32 -> vector<8x128xf32>
    %199 = vector.broadcast %197 : f32 to vector<8x128xf32>
    %200 = arith.mulf %199, %198 : vector<8x128xf32>
    %201 = arith.addf %196, %200 : vector<8x128xf32>
    %c25 = arith.constant 25 : index
    %202 = memref.load %arg2[%c25] : memref<58xf32, #tpu.memory_space<smem>>
    %c1_i32_30 = arith.constant 1 : i32
    %203 = tpu.dynamic_rotate %177 by %c1_i32_30 dim 1 : vector<8x128xf32>, i32 -> vector<8x128xf32>
    %204 = vector.broadcast %202 : f32 to vector<8x128xf32>
    %205 = arith.mulf %204, %203 : vector<8x128xf32>
    %206 = arith.addf %201, %205 : vector<8x128xf32>
    %c26 = arith.constant 26 : index
    %207 = memref.load %arg2[%c26] : memref<58xf32, #tpu.memory_space<smem>>
    %208 = vector.broadcast %207 : f32 to vector<8x128xf32>
    %209 = arith.mulf %208, %177 : vector<8x128xf32>
    %210 = arith.addf %206, %209 : vector<8x128xf32>
    %c27 = arith.constant 27 : index
    %211 = memref.load %arg2[%c27] : memref<58xf32, #tpu.memory_space<smem>>
    %c127_i32_31 = arith.constant 127 : i32
    %212 = tpu.dynamic_rotate %177 by %c127_i32_31 dim 1 : vector<8x128xf32>, i32 -> vector<8x128xf32>
    %213 = vector.broadcast %211 : f32 to vector<8x128xf32>
    %214 = arith.mulf %213, %212 : vector<8x128xf32>
    %215 = arith.addf %210, %214 : vector<8x128xf32>
    %c28 = arith.constant 28 : index
    %216 = memref.load %arg2[%c28] : memref<58xf32, #tpu.memory_space<smem>>
    %c126_i32_32 = arith.constant 126 : i32
    %217 = tpu.dynamic_rotate %177 by %c126_i32_32 dim 1 : vector<8x128xf32>, i32 -> vector<8x128xf32>
    %218 = vector.broadcast %216 : f32 to vector<8x128xf32>
    %219 = arith.mulf %218, %217 : vector<8x128xf32>
    %220 = arith.addf %215, %219 : vector<8x128xf32>
    %c29 = arith.constant 29 : index
    %221 = memref.load %arg2[%c29] : memref<58xf32, #tpu.memory_space<smem>>
    %c125_i32_33 = arith.constant 125 : i32
    %222 = tpu.dynamic_rotate %177 by %c125_i32_33 dim 1 : vector<8x128xf32>, i32 -> vector<8x128xf32>
    %223 = vector.broadcast %221 : f32 to vector<8x128xf32>
    %224 = arith.mulf %223, %222 : vector<8x128xf32>
    %225 = arith.addf %220, %224 : vector<8x128xf32>
    %c30 = arith.constant 30 : index
    %226 = memref.load %arg2[%c30] : memref<58xf32, #tpu.memory_space<smem>>
    %c4_i32_34 = arith.constant 4 : i32
    %227 = tpu.dynamic_rotate %5 by %c4_i32_34 dim 1 : vector<8x128xf32>, i32 -> vector<8x128xf32>
    %228 = vector.broadcast %226 : f32 to vector<8x128xf32>
    %229 = arith.mulf %228, %227 : vector<8x128xf32>
    %c31 = arith.constant 31 : index
    %230 = memref.load %arg2[%c31] : memref<58xf32, #tpu.memory_space<smem>>
    %c3_i32_35 = arith.constant 3 : i32
    %231 = tpu.dynamic_rotate %5 by %c3_i32_35 dim 1 : vector<8x128xf32>, i32 -> vector<8x128xf32>
    %232 = vector.broadcast %230 : f32 to vector<8x128xf32>
    %233 = arith.mulf %232, %231 : vector<8x128xf32>
    %234 = arith.addf %229, %233 : vector<8x128xf32>
    %c32 = arith.constant 32 : index
    %235 = memref.load %arg2[%c32] : memref<58xf32, #tpu.memory_space<smem>>
    %c2_i32_36 = arith.constant 2 : i32
    %236 = tpu.dynamic_rotate %5 by %c2_i32_36 dim 1 : vector<8x128xf32>, i32 -> vector<8x128xf32>
    %237 = vector.broadcast %235 : f32 to vector<8x128xf32>
    %238 = arith.mulf %237, %236 : vector<8x128xf32>
    %239 = arith.addf %234, %238 : vector<8x128xf32>
    %c33 = arith.constant 33 : index
    %240 = memref.load %arg2[%c33] : memref<58xf32, #tpu.memory_space<smem>>
    %c1_i32_37 = arith.constant 1 : i32
    %241 = tpu.dynamic_rotate %5 by %c1_i32_37 dim 1 : vector<8x128xf32>, i32 -> vector<8x128xf32>
    %242 = vector.broadcast %240 : f32 to vector<8x128xf32>
    %243 = arith.mulf %242, %241 : vector<8x128xf32>
    %244 = arith.addf %239, %243 : vector<8x128xf32>
    %c34 = arith.constant 34 : index
    %245 = memref.load %arg2[%c34] : memref<58xf32, #tpu.memory_space<smem>>
    %246 = vector.broadcast %245 : f32 to vector<8x128xf32>
    %247 = arith.mulf %246, %5 : vector<8x128xf32>
    %248 = arith.addf %244, %247 : vector<8x128xf32>
    %c35 = arith.constant 35 : index
    %249 = memref.load %arg2[%c35] : memref<58xf32, #tpu.memory_space<smem>>
    %c127_i32_38 = arith.constant 127 : i32
    %250 = tpu.dynamic_rotate %5 by %c127_i32_38 dim 1 : vector<8x128xf32>, i32 -> vector<8x128xf32>
    %251 = vector.broadcast %249 : f32 to vector<8x128xf32>
    %252 = arith.mulf %251, %250 : vector<8x128xf32>
    %253 = arith.addf %248, %252 : vector<8x128xf32>
    %c36 = arith.constant 36 : index
    %254 = memref.load %arg2[%c36] : memref<58xf32, #tpu.memory_space<smem>>
    %c126_i32_39 = arith.constant 126 : i32
    %255 = tpu.dynamic_rotate %5 by %c126_i32_39 dim 1 : vector<8x128xf32>, i32 -> vector<8x128xf32>
    %256 = vector.broadcast %254 : f32 to vector<8x128xf32>
    %257 = arith.mulf %256, %255 : vector<8x128xf32>
    %258 = arith.addf %253, %257 : vector<8x128xf32>
    %c37 = arith.constant 37 : index
    %259 = memref.load %arg2[%c37] : memref<58xf32, #tpu.memory_space<smem>>
    %c125_i32_40 = arith.constant 125 : i32
    %260 = tpu.dynamic_rotate %5 by %c125_i32_40 dim 1 : vector<8x128xf32>, i32 -> vector<8x128xf32>
    %261 = vector.broadcast %259 : f32 to vector<8x128xf32>
    %262 = arith.mulf %261, %260 : vector<8x128xf32>
    %263 = arith.addf %258, %262 : vector<8x128xf32>
    %c38 = arith.constant 38 : index
    %264 = memref.load %arg2[%c38] : memref<58xf32, #tpu.memory_space<smem>>
    %c124_i32_41 = arith.constant 124 : i32
    %265 = tpu.dynamic_rotate %5 by %c124_i32_41 dim 1 : vector<8x128xf32>, i32 -> vector<8x128xf32>
    %266 = vector.broadcast %264 : f32 to vector<8x128xf32>
    %267 = arith.mulf %266, %265 : vector<8x128xf32>
    %268 = arith.addf %263, %267 : vector<8x128xf32>
    %c39 = arith.constant 39 : index
    %269 = memref.load %arg2[%c39] : memref<58xf32, #tpu.memory_space<smem>>
    %c123_i32_42 = arith.constant 123 : i32
    %270 = tpu.dynamic_rotate %5 by %c123_i32_42 dim 1 : vector<8x128xf32>, i32 -> vector<8x128xf32>
    %271 = vector.broadcast %269 : f32 to vector<8x128xf32>
    %272 = arith.mulf %271, %270 : vector<8x128xf32>
    %273 = arith.addf %268, %272 : vector<8x128xf32>
    %274 = arith.addf %225, %273 : vector<8x128xf32>
    %c83_i32 = arith.constant 83 : i32
    %275 = vector.broadcast %c83_i32 : i32 to vector<8x128xi32>
    %276 = arith.cmpi slt, %0, %275 : vector<8x128xi32>
    %277 = arith.andi %3, %276 : vector<8x128xi1>
    %cst_43 = arith.constant 0.000000e+00 : f32
    %278 = vector.broadcast %cst_43 : f32 to vector<8x128xf32>
    %279 = arith.select %277, %274, %278 : vector<8x128xi1>, vector<8x128xf32>
    %280 = vector.shape_cast %279 : vector<8x128xf32> to vector<1x8x128xf32>
    %cst_44 = arith.constant dense<0.000000e+00> : vector<1xf32>
    %281 = vector.multi_reduction <add>, %280, %cst_44 [1, 2] : vector<1x8x128xf32> to vector<1xf32>
    %282 = vector.shape_cast %281 : vector<1xf32> to vector<1x1x1xf32>
    %283 = vector.extract %282[0, 0, 0] : f32 from vector<1x1x1xf32>
    %284 = vector.broadcast %283 : f32 to vector<1x1xf32>
    %285 = arith.mulf %279, %279 : vector<8x128xf32>
    %286 = vector.shape_cast %285 : vector<8x128xf32> to vector<1x8x128xf32>
    %cst_45 = arith.constant dense<0.000000e+00> : vector<1xf32>
    %287 = vector.multi_reduction <add>, %286, %cst_45 [1, 2] : vector<1x8x128xf32> to vector<1xf32>
    %288 = vector.shape_cast %287 : vector<1xf32> to vector<1x1x1xf32>
    %289 = vector.extract %288[0, 0, 0] : f32 from vector<1x1x1xf32>
    %290 = vector.broadcast %289 : f32 to vector<1x1xf32>
    %cst_46 = arith.constant 0.00602409616 : f32
    %291 = vector.broadcast %cst_46 : f32 to vector<1x1xf32>
    %292 = arith.mulf %284, %291 : vector<1x1xf32>
    %cst_47 = arith.constant 0.00602409616 : f32
    %293 = vector.broadcast %cst_47 : f32 to vector<1x1xf32>
    %294 = arith.mulf %290, %293 : vector<1x1xf32>
    %295 = arith.mulf %292, %292 : vector<1x1xf32>
    %296 = arith.subf %294, %295 : vector<1x1xf32>
    %cst_48 = arith.constant 9.99999974E-6 : f32
    %297 = vector.broadcast %cst_48 : f32 to vector<1x1xf32>
    %298 = arith.addf %296, %297 : vector<1x1xf32>
    %299 = math.rsqrt %298 : vector<1x1xf32>
    %c54 = arith.constant 54 : index
    %300 = memref.load %arg2[%c54] : memref<58xf32, #tpu.memory_space<smem>>
    %301 = vector.broadcast %300 : f32 to vector<1x1xf32>
    %302 = arith.mulf %299, %301 : vector<1x1xf32>
    %c55 = arith.constant 55 : index
    %303 = memref.load %arg2[%c55] : memref<58xf32, #tpu.memory_space<smem>>
    %304 = arith.mulf %292, %302 : vector<1x1xf32>
    %305 = vector.broadcast %303 : f32 to vector<1x1xf32>
    %306 = arith.subf %305, %304 : vector<1x1xf32>
    %307 = vector.broadcast %302 : vector<1x1xf32> to vector<8x128xf32>
    %308 = arith.mulf %279, %307 : vector<8x128xf32>
    %309 = vector.broadcast %306 : vector<1x1xf32> to vector<8x128xf32>
    %310 = arith.addf %308, %309 : vector<8x128xf32>
    %cst_49 = arith.constant 0.000000e+00 : f32
    %311 = vector.broadcast %cst_49 : f32 to vector<8x128xf32>
    %312 = arith.select %277, %310, %311 : vector<8x128xi1>, vector<8x128xf32>
    %c40 = arith.constant 40 : index
    %313 = memref.load %arg2[%c40] : memref<58xf32, #tpu.memory_space<smem>>
    %c5_i32_50 = arith.constant 5 : i32
    %314 = tpu.dynamic_rotate %312 by %c5_i32_50 dim 1 : vector<8x128xf32>, i32 -> vector<8x128xf32>
    %315 = vector.broadcast %313 : f32 to vector<8x128xf32>
    %316 = arith.mulf %315, %314 : vector<8x128xf32>
    %c41 = arith.constant 41 : index
    %317 = memref.load %arg2[%c41] : memref<58xf32, #tpu.memory_space<smem>>
    %c4_i32_51 = arith.constant 4 : i32
    %318 = tpu.dynamic_rotate %312 by %c4_i32_51 dim 1 : vector<8x128xf32>, i32 -> vector<8x128xf32>
    %319 = vector.broadcast %317 : f32 to vector<8x128xf32>
    %320 = arith.mulf %319, %318 : vector<8x128xf32>
    %321 = arith.addf %316, %320 : vector<8x128xf32>
    %c42 = arith.constant 42 : index
    %322 = memref.load %arg2[%c42] : memref<58xf32, #tpu.memory_space<smem>>
    %c3_i32_52 = arith.constant 3 : i32
    %323 = tpu.dynamic_rotate %312 by %c3_i32_52 dim 1 : vector<8x128xf32>, i32 -> vector<8x128xf32>
    %324 = vector.broadcast %322 : f32 to vector<8x128xf32>
    %325 = arith.mulf %324, %323 : vector<8x128xf32>
    %326 = arith.addf %321, %325 : vector<8x128xf32>
    %c43 = arith.constant 43 : index
    %327 = memref.load %arg2[%c43] : memref<58xf32, #tpu.memory_space<smem>>
    %c2_i32_53 = arith.constant 2 : i32
    %328 = tpu.dynamic_rotate %312 by %c2_i32_53 dim 1 : vector<8x128xf32>, i32 -> vector<8x128xf32>
    %329 = vector.broadcast %327 : f32 to vector<8x128xf32>
    %330 = arith.mulf %329, %328 : vector<8x128xf32>
    %331 = arith.addf %326, %330 : vector<8x128xf32>
    %c44 = arith.constant 44 : index
    %332 = memref.load %arg2[%c44] : memref<58xf32, #tpu.memory_space<smem>>
    %c1_i32_54 = arith.constant 1 : i32
    %333 = tpu.dynamic_rotate %312 by %c1_i32_54 dim 1 : vector<8x128xf32>, i32 -> vector<8x128xf32>
    %334 = vector.broadcast %332 : f32 to vector<8x128xf32>
    %335 = arith.mulf %334, %333 : vector<8x128xf32>
    %336 = arith.addf %331, %335 : vector<8x128xf32>
    %c45 = arith.constant 45 : index
    %337 = memref.load %arg2[%c45] : memref<58xf32, #tpu.memory_space<smem>>
    %338 = vector.broadcast %337 : f32 to vector<8x128xf32>
    %339 = arith.mulf %338, %312 : vector<8x128xf32>
    %340 = arith.addf %336, %339 : vector<8x128xf32>
    %c46 = arith.constant 46 : index
    %341 = memref.load %arg2[%c46] : memref<58xf32, #tpu.memory_space<smem>>
    %c127_i32_55 = arith.constant 127 : i32
    %342 = tpu.dynamic_rotate %312 by %c127_i32_55 dim 1 : vector<8x128xf32>, i32 -> vector<8x128xf32>
    %343 = vector.broadcast %341 : f32 to vector<8x128xf32>
    %344 = arith.mulf %343, %342 : vector<8x128xf32>
    %345 = arith.addf %340, %344 : vector<8x128xf32>
    %c47 = arith.constant 47 : index
    %346 = memref.load %arg2[%c47] : memref<58xf32, #tpu.memory_space<smem>>
    %c126_i32_56 = arith.constant 126 : i32
    %347 = tpu.dynamic_rotate %312 by %c126_i32_56 dim 1 : vector<8x128xf32>, i32 -> vector<8x128xf32>
    %348 = vector.broadcast %346 : f32 to vector<8x128xf32>
    %349 = arith.mulf %348, %347 : vector<8x128xf32>
    %350 = arith.addf %345, %349 : vector<8x128xf32>
    %c48 = arith.constant 48 : index
    %351 = memref.load %arg2[%c48] : memref<58xf32, #tpu.memory_space<smem>>
    %c125_i32_57 = arith.constant 125 : i32
    %352 = tpu.dynamic_rotate %312 by %c125_i32_57 dim 1 : vector<8x128xf32>, i32 -> vector<8x128xf32>
    %353 = vector.broadcast %351 : f32 to vector<8x128xf32>
    %354 = arith.mulf %353, %352 : vector<8x128xf32>
    %355 = arith.addf %350, %354 : vector<8x128xf32>
    %c49 = arith.constant 49 : index
    %356 = memref.load %arg2[%c49] : memref<58xf32, #tpu.memory_space<smem>>
    %c124_i32_58 = arith.constant 124 : i32
    %357 = tpu.dynamic_rotate %312 by %c124_i32_58 dim 1 : vector<8x128xf32>, i32 -> vector<8x128xf32>
    %358 = vector.broadcast %356 : f32 to vector<8x128xf32>
    %359 = arith.mulf %358, %357 : vector<8x128xf32>
    %360 = arith.addf %355, %359 : vector<8x128xf32>
    %c84_i32 = arith.constant 84 : i32
    %361 = vector.broadcast %c84_i32 : i32 to vector<8x128xi32>
    %362 = arith.cmpi slt, %0, %361 : vector<8x128xi32>
    %363 = arith.andi %3, %362 : vector<8x128xi1>
    %cst_59 = arith.constant 0.000000e+00 : f32
    %364 = vector.broadcast %cst_59 : f32 to vector<8x128xf32>
    %365 = arith.select %363, %360, %364 : vector<8x128xi1>, vector<8x128xf32>
    %366 = vector.shape_cast %365 : vector<8x128xf32> to vector<1x8x128xf32>
    %cst_60 = arith.constant dense<0.000000e+00> : vector<1xf32>
    %367 = vector.multi_reduction <add>, %366, %cst_60 [1, 2] : vector<1x8x128xf32> to vector<1xf32>
    %368 = vector.shape_cast %367 : vector<1xf32> to vector<1x1x1xf32>
    %369 = vector.extract %368[0, 0, 0] : f32 from vector<1x1x1xf32>
    %370 = vector.broadcast %369 : f32 to vector<1x1xf32>
    %371 = arith.mulf %365, %365 : vector<8x128xf32>
    %372 = vector.shape_cast %371 : vector<8x128xf32> to vector<1x8x128xf32>
    %cst_61 = arith.constant dense<0.000000e+00> : vector<1xf32>
    %373 = vector.multi_reduction <add>, %372, %cst_61 [1, 2] : vector<1x8x128xf32> to vector<1xf32>
    %374 = vector.shape_cast %373 : vector<1xf32> to vector<1x1x1xf32>
    %375 = vector.extract %374[0, 0, 0] : f32 from vector<1x1x1xf32>
    %376 = vector.broadcast %375 : f32 to vector<1x1xf32>
    %cst_62 = arith.constant 0.00595238106 : f32
    %377 = vector.broadcast %cst_62 : f32 to vector<1x1xf32>
    %378 = arith.mulf %370, %377 : vector<1x1xf32>
    %cst_63 = arith.constant 0.00595238106 : f32
    %379 = vector.broadcast %cst_63 : f32 to vector<1x1xf32>
    %380 = arith.mulf %376, %379 : vector<1x1xf32>
    %381 = arith.mulf %378, %378 : vector<1x1xf32>
    %382 = arith.subf %380, %381 : vector<1x1xf32>
    %cst_64 = arith.constant 9.99999974E-6 : f32
    %383 = vector.broadcast %cst_64 : f32 to vector<1x1xf32>
    %384 = arith.addf %382, %383 : vector<1x1xf32>
    %385 = math.rsqrt %384 : vector<1x1xf32>
    %c56 = arith.constant 56 : index
    %386 = memref.load %arg2[%c56] : memref<58xf32, #tpu.memory_space<smem>>
    %387 = vector.broadcast %386 : f32 to vector<1x1xf32>
    %388 = arith.mulf %385, %387 : vector<1x1xf32>
    %c57 = arith.constant 57 : index
    %389 = memref.load %arg2[%c57] : memref<58xf32, #tpu.memory_space<smem>>
    %390 = arith.mulf %378, %388 : vector<1x1xf32>
    %391 = vector.broadcast %389 : f32 to vector<1x1xf32>
    %392 = arith.subf %391, %390 : vector<1x1xf32>
    %393 = vector.broadcast %388 : vector<1x1xf32> to vector<8x128xf32>
    %394 = arith.mulf %365, %393 : vector<8x128xf32>
    %395 = vector.broadcast %392 : vector<1x1xf32> to vector<8x128xf32>
    %396 = arith.addf %394, %395 : vector<8x128xf32>
    %cst_65 = arith.constant 0.000000e+00 : f32
    %397 = vector.broadcast %cst_65 : f32 to vector<8x128xf32>
    %398 = arith.select %363, %396, %397 : vector<8x128xi1>, vector<8x128xf32>
    %c0_66 = arith.constant 0 : index
    %c0_67 = arith.constant 0 : index
    %399 = vector.load %arg3[%c0_66, %c0_67] : memref<8x128xf32, #tpu.memory_space<vmem>>, vector<8x128xf32>
    tpu.vector_store %arg3[%c0_66, %c0_67], %398 {strides = array<i32>} : memref<8x128xf32, #tpu.memory_space<vmem>>, vector<8x128xf32>,
    return
  }
}

</mosaic_0001>

<llo_original>
// kernel: tpu_custom_call.1
$region0: #{tpu_custom_call.1}
  #allocation0 [shape = 'u32[]', space=smem, size = 0x4, offset = 0x4, fixed_abs, tag = 'smem constant byte address 0x4 - core index']
  #allocation1 [shape = 'u32[72,128]{1,0:T(1,128)}', space=vmem, size = 0x9000, scoped, tag = 'internal scratch']
  %s0 = inlined_call_operand.hbm [shape: f32[8,128], index: 0, kind: input, shape index: {}]
  %s1 = inlined_call_operand.hbm [shape: f32[8,128], index: 1, kind: input, shape index: {}]
  %s2 = inlined_call_operand.vmem [shape: f32[58], index: 2, kind: input, shape index: {}]
  %s3 = inlined_call_operand.hbm [shape: f32[8,128], index: 3, kind: output, shape index: {}]
  %s4 = sld [smem:[#allocation0]]
  $region34: #{tpu_custom_call.1} parent=0
    _
  %s6 = ssub.s32 1, %s4
  %s7 = scalar_select 0, %s6, %s4
  $region1: #{tpu_custom_call.1} parent=0
    #allocation2 [shape = 'u8[4096]{0}', space=vmem, size = 0x1000, scoped, tag = 'input window, operand 0, single buffered']
    #allocation3 [shape = 's32[1]{0}', space=sflag, size = 0x4, scoped, tag = 'scoped memory for tpu_custom_call.1']
    #allocation4 [shape = 's32[1]{0}', space=sflag, size = 0x4, scoped, tag = 'scoped memory for tpu_custom_call.1']
    #allocation5 [shape = 's32[1]{0}', space=sflag, size = 0x4, scoped, tag = 'scoped memory for tpu_custom_call.1']
    #allocation6 [shape = 'u8[4096]{0}', space=vmem, size = 0x1000, scoped, tag = 'input window, operand 1, single buffered']
    #allocation7 [shape = 's32[1]{0}', space=sflag, size = 0x4, scoped, tag = 'scoped memory for tpu_custom_call.1']
    #allocation8 [shape = 'u8[512]{0}', space=smem, size = 0x200, scoped, tag = 'input window, operand 2, single buffered']
    #allocation9 [shape = 'u8[4096]{0}', space=vmem, size = 0x1000, scoped, tag = 'output window, operand 0, single buffered']
    %8 = vsyncpa [#allocation3], 0
    %9 = vsyncpa [#allocation7], 0
    %10 = vsyncpa [#allocation5], 0
    %11 = vsyncpa [#allocation4], 0
    // Predicated region
    $region2: #{tpu_custom_call.1} parent=1 // pred_check
      _
    $region3: #{tpu_custom_call.1} parent=1 // pred_check_branch
      %13 = sbr.rel (0) target = $region5
    $region4: #{tpu_custom_call.1} parent=1 // pred_region
      %15 = vsyncadd [#allocation3], 0
      %s17 = sshll.u32 %s0, 4
      %s18 = int_to_ptr.hbm [resolvable:$true] %s17
      %s19 = sshll.u32 [#allocation2], 4
      %s20 = int_to_ptr.vmem [resolvable:$true] %s19
      %22 = dma.hbm_to_vmem [thread:$0]  %s18, 128, %s20, [#allocation3]
    $region5: #{tpu_custom_call.1} parent=1 // pred_fallthru
      _
    // Predicated region
    $region6: #{tpu_custom_call.1} parent=1 // pred_check
      _
    $region7: #{tpu_custom_call.1} parent=1 // pred_check_branch
      %24 = sbr.rel (0) target = $region9
    $region8: #{tpu_custom_call.1} parent=1 // pred_region
      %26 = vsyncadd [#allocation7], 0
      %s28 = sshll.u32 %s1, 4
      %s29 = int_to_ptr.hbm [resolvable:$true] %s28
      %s30 = sshll.u32 [#allocation6], 4
      %s31 = int_to_ptr.vmem [resolvable:$true] %s30
      %33 = dma.hbm_to_vmem [thread:$0]  %s29, 128, %s31, [#allocation7]
    $region9: #{tpu_custom_call.1} parent=1 // pred_fallthru
      _
    // Predicated region
    $region10: #{tpu_custom_call.1} parent=1 // pred_check
      _
    $region11: #{tpu_custom_call.1} parent=1 // pred_check_branch
      %35 = sbr.rel (0) target = $region13
    $region12: #{tpu_custom_call.1} parent=1 // pred_region
      %37 = vsyncadd [#allocation5], 0
      %s39 = sshll.u32 %s2, 4
      %s40 = int_to_ptr.vmem [resolvable:$true] %s39
      %42 = dma.vmem_to_smem %s40, 16, [#allocation8], [#allocation5]
    $region13: #{tpu_custom_call.1} parent=1 // pred_fallthru
      _
    // Predicated region
    $region14: #{tpu_custom_call.1} parent=1 // pred_check
      _
    $region15: #{tpu_custom_call.1} parent=1 // pred_check_branch
      %44 = sbr.rel (0) target = $region17
    $region16: #{tpu_custom_call.1} parent=1 // pred_region
      %46 = dma.done [#allocation3], 128
    $region17: #{tpu_custom_call.1} parent=1 // pred_fallthru
      _
    // Predicated region
    $region18: #{tpu_custom_call.1} parent=1 // pred_check
      _
    $region19: #{tpu_custom_call.1} parent=1 // pred_check_branch
      %48 = sbr.rel (0) target = $region21
    $region20: #{tpu_custom_call.1} parent=1 // pred_region
      %50 = dma.done [#allocation7], 128
    $region21: #{tpu_custom_call.1} parent=1 // pred_fallthru
      _
    // Predicated region
    $region22: #{tpu_custom_call.1} parent=1 // pred_check
      _
    $region23: #{tpu_custom_call.1} parent=1 // pred_check_branch
      %52 = sbr.rel (0) target = $region25
    $region24: #{tpu_custom_call.1} parent=1 // pred_region
      %54 = dma.done [#allocation5], 16
    $region25: #{tpu_custom_call.1} parent=1 // pred_fallthru
      _
    %55 = sfence
    %v56 = vlaneseq
    %v57 = vand.u32 %v56, 127
    %v58 = vlaneseq
    %v59 = vshrl.u32 %v58, 7
    %vm60 = vcmp.lt.s32.totalorder %v59, 2
    %v61 = vld [vmem:[#allocation2] sm:$0xff]
    %v62 = vld [vmem:[#allocation6] sm:$0xff]
    %s63 = sld [smem:[#allocation8]]
    %64 = vrot.lane.b32.xlu0 %v61, 4
    %v65 = vpop.permute.xlu0 %64
    %v66 = vstv %s63
    %v67 = vmul.f32 %v66, %v65
    %s68 = sld [smem:[#allocation8 + $0x1]]
    %69 = vrot.lane.b32.xlu0 %v61, 3
    %v70 = vpop.permute.xlu0 %69
    %v71 = vstv %s68
    %v72 = vmul.f32 %v71, %v70
    %v73 = vadd.f32 %v67, %v72
    %s74 = sld [smem:[#allocation8 + $0x2]]
    %75 = vrot.lane.b32.xlu0 %v61, 2
    %v76 = vpop.permute.xlu0 %75
    %v77 = vstv %s74
    %v78 = vmul.f32 %v77, %v76
    %v79 = vadd.f32 %v73, %v78
    %s80 = sld [smem:[#allocation8 + $0x3]]
    %81 = vrot.lane.b32.xlu0 %v61, 1
    %v82 = vpop.permute.xlu0 %81
    %v83 = vstv %s80
    %v84 = vmul.f32 %v83, %v82
    %v85 = vadd.f32 %v79, %v84
    %s86 = sld [smem:[#allocation8 + $0x4]]
    %v87 = vstv %s86
    %v88 = vmul.f32 %v87, %v61
    %v89 = vadd.f32 %v85, %v88
    %s90 = sld [smem:[#allocation8 + $0x5]]
    %91 = vrot.lane.b32.xlu0 %v61, 127
    %v92 = vpop.permute.xlu0 %91
    %v93 = vstv %s90
    %v94 = vmul.f32 %v93, %v92
    %v95 = vadd.f32 %v89, %v94
    %s96 = sld [smem:[#allocation8 + $0x6]]
    %97 = vrot.lane.b32.xlu0 %v61, 126
    %v98 = vpop.permute.xlu0 %97
    %v99 = vstv %s96
    %v100 = vmul.f32 %v99, %v98
    %v101 = vadd.f32 %v95, %v100
    %s102 = sld [smem:[#allocation8 + $0x7]]
    %103 = vrot.lane.b32.xlu0 %v61, 125
    %v104 = vpop.permute.xlu0 %103
    %v105 = vstv %s102
    %v106 = vmul.f32 %v105, %v104
    %v107 = vadd.f32 %v101, %v106
    %s108 = sld [smem:[#allocation8 + $0x8]]
    %109 = vrot.lane.b32.xlu0 %v61, 124
    %v110 = vpop.permute.xlu0 %109
    %v111 = vstv %s108
    %v112 = vmul.f32 %v111, %v110
    %v113 = vadd.f32 %v107, %v112
    %s114 = sld [smem:[#allocation8 + $0x9]]
    %115 = vrot.lane.b32.xlu0 %v61, 123
    %v116 = vpop.permute.xlu0 %115
    %v117 = vstv %s114
    %v118 = vmul.f32 %v117, %v116
    %v119 = vadd.f32 %v113, %v118
    %vm120 = vcmp.lt.s32.totalorder %v57, 79
    %vm121 = vmand %vm60, %vm120
    %v122 = vsel %vm121, %v119, 0.0
    %123 = vadd.xlane.f32.xlu0 %v122
    %v124 = vpop.xlane.xlu0 %123
    %v125 = vrot.slane %v124, 4
    %v126 = vadd.f32 %v124, %v125
    %v127 = vrot.slane %v126, 2
    %v128 = vadd.f32 %v126, %v127
    %v129 = vrot.slane %v128, 1
    %v130 = vadd.f32 %v128, %v129
    %s131 = vtos %v130
    %v132 = vstv %s131
    %v133 = vmul.f32 %v122, %v122
    %134 = vadd.xlane.f32.xlu0 %v133
    %v135 = vpop.xlane.xlu0 %134
    %v136 = vrot.slane %v135, 4
    %v137 = vadd.f32 %v135, %v136
    %v138 = vrot.slane %v137, 2
    %v139 = vadd.f32 %v137, %v138
    %v140 = vrot.slane %v139, 1
    %v141 = vadd.f32 %v139, %v140
    %s142 = vtos %v141
    %v143 = vstv %s142
    %v144 = vmul.f32 %v132, 0.006329114
    %v145 = vmul.f32 %v143, 0.006329114
    %v146 = vmul.f32 %v144, %v144
    %v147 = vsub.f32 %v145, %v146
    %v148 = vadd.f32 %v147, 1e-05
    %v149 = vrsqrt.pop %v148
    %v150 = vmul.f32 %v149, %v148
    %v151 = vmul.f32 %v150, %v149
    %v152 = vmul.f32 0.5, %v151
    %v153 = vsub.f32 1.5, %v152
    %v154 = vmul.f32 %v149, %v153
    %vm155 = vweird.f32 %v148
    %vm156 = vweird.f32 %v149
    %vm157 = vmor %vm155, %vm156
    %v158 = vsel %vm157, %v149, %v154
    %s159 = sld [smem:[#allocation8 + $0x32]]
    %v160 = vstv %s159
    %v161 = vmul.f32 %v158, %v160
    %s162 = sld [smem:[#allocation8 + $0x33]]
    %v163 = vmul.f32 %v144, %v161
    %v164 = vstv %s162
    %v165 = vsub.f32 %v164, %v163
    %v166 = vmul.f32 %v122, %v161
    %v167 = vadd.f32 %v166, %v165
    %v168 = vsel %vm121, %v167, 0.0
    %s169 = sld [smem:[#allocation8 + $0xa]]
    %170 = vrot.lane.b32.xlu0 %v168, 5
    %v171 = vpop.permute.xlu0 %170
    %v172 = vstv %s169
    %v173 = vmul.f32 %v172, %v171
    %s174 = sld [smem:[#allocation8 + $0xb]]
    %175 = vrot.lane.b32.xlu0 %v168, 4
    %v176 = vpop.permute.xlu0 %175
    %v177 = vstv %s174
    %v178 = vmul.f32 %v177, %v176
    %v179 = vadd.f32 %v173, %v178
    %s180 = sld [smem:[#allocation8 + $0xc]]
    %181 = vrot.lane.b32.xlu0 %v168, 3
    %v182 = vpop.permute.xlu0 %181
    %v183 = vstv %s180
    %v184 = vmul.f32 %v183, %v182
    %v185 = vadd.f32 %v179, %v184
    %s186 = sld [smem:[#allocation8 + $0xd]]
    %187 = vrot.lane.b32.xlu0 %v168, 2
    %v188 = vpop.permute.xlu0 %187
    %v189 = vstv %s186
    %v190 = vmul.f32 %v189, %v188
    %v191 = vadd.f32 %v185, %v190
    %s192 = sld [smem:[#allocation8 + $0xe]]
    %193 = vrot.lane.b32.xlu0 %v168, 1
    %v194 = vpop.permute.xlu0 %193
    %v195 = vstv %s192
    %v196 = vmul.f32 %v195, %v194
    %v197 = vadd.f32 %v191, %v196
    %s198 = sld [smem:[#allocation8 + $0xf]]
    %v199 = vstv %s198
    %v200 = vmul.f32 %v199, %v168
    %v201 = vadd.f32 %v197, %v200
    %s202 = sld [smem:[#allocation8 + $0x10]]
    %203 = vrot.lane.b32.xlu0 %v168, 127
    %v204 = vpop.permute.xlu0 %203
    %v205 = vstv %s202
    %v206 = vmul.f32 %v205, %v204
    %v207 = vadd.f32 %v201, %v206
    %s208 = sld [smem:[#allocation8 + $0x11]]
    %209 = vrot.lane.b32.xlu0 %v168, 126
    %v210 = vpop.permute.xlu0 %209
    %v211 = vstv %s208
    %v212 = vmul.f32 %v211, %v210
    %v213 = vadd.f32 %v207, %v212
    %s214 = sld [smem:[#allocation8 + $0x12]]
    %215 = vrot.lane.b32.xlu0 %v168, 125
    %v216 = vpop.permute.xlu0 %215
    %v217 = vstv %s214
    %v218 = vmul.f32 %v217, %v216
    %v219 = vadd.f32 %v213, %v218
    %s220 = sld [smem:[#allocation8 + $0x13]]
    %221 = vrot.lane.b32.xlu0 %v168, 124
    %v222 = vpop.permute.xlu0 %221
    %v223 = vstv %s220
    %v224 = vmul.f32 %v223, %v222
    %v225 = vadd.f32 %v219, %v224
    %vm226 = vcmp.lt.s32.totalorder %v57, 80
    %vm227 = vmand %vm60, %vm226
    %v228 = vsel %vm227, %v225, 0.0
    %229 = vadd.xlane.f32.xlu0 %v228
    %v230 = vpop.xlane.xlu0 %229
    %v231 = vrot.slane %v230, 4
    %v232 = vadd.f32 %v230, %v231
    %v233 = vrot.slane %v232, 2
    %v234 = vadd.f32 %v232, %v233
    %v235 = vrot.slane %v234, 1
    %v236 = vadd.f32 %v234, %v235
    %s237 = vtos %v236
    %v238 = vstv %s237
    %v239 = vmul.f32 %v228, %v228
    %240 = vadd.xlane.f32.xlu0 %v239
    %v241 = vpop.xlane.xlu0 %240
    %v242 = vrot.slane %v241, 4
    %v243 = vadd.f32 %v241, %v242
    %v244 = vrot.slane %v243, 2
    %v245 = vadd.f32 %v243, %v244
    %v246 = vrot.slane %v245, 1
    %v247 = vadd.f32 %v245, %v246
    %s248 = vtos %v247
    %v249 = vstv %s248
    %v250 = vmul.f32 %v238, 0.00625
    %v251 = vmul.f32 %v249, 0.00625
    %v252 = vmul.f32 %v250, %v250
    %v253 = vsub.f32 %v251, %v252
    %v254 = vadd.f32 %v253, 1e-05
    %v255 = vrsqrt.pop %v254
    %v256 = vmul.f32 %v255, %v254
    %v257 = vmul.f32 %v256, %v255
    %v258 = vmul.f32 0.5, %v257
    %v259 = vsub.f32 1.5, %v258
    %v260 = vmul.f32 %v255, %v259
    %vm261 = vweird.f32 %v254
    %vm262 = vweird.f32 %v255
    %vm263 = vmor %vm261, %vm262
    %v264 = vsel %vm263, %v255, %v260
    %s265 = sld [smem:[#allocation8 + $0x34]]
    %v266 = vstv %s265
    %v267 = vmul.f32 %v264, %v266
    %s268 = sld [smem:[#allocation8 + $0x35]]
    %v269 = vmul.f32 %v250, %v267
    %v270 = vstv %s268
    %v271 = vsub.f32 %v270, %v269
    %v272 = vmul.f32 %v228, %v267
    %v273 = vadd.f32 %v272, %v271
    %v274 = vsel %vm227, %v273, 0.0
    %s275 = sld [smem:[#allocation8 + $0x14]]
    %276 = vrot.lane.b32.xlu0 %v274, 6
    %v277 = vpop.permute.xlu0 %276
    %v278 = vstv %s275
    %v279 = vmul.f32 %v278, %v277
    %s280 = sld [smem:[#allocation8 + $0x15]]
    %281 = vrot.lane.b32.xlu0 %v274, 5
    %v282 = vpop.permute.xlu0 %281
    %v283 = vstv %s280
    %v284 = vmul.f32 %v283, %v282
    %v285 = vadd.f32 %v279, %v284
    %s286 = sld [smem:[#allocation8 + $0x16]]
    %287 = vrot.lane.b32.xlu0 %v274, 4
    %v288 = vpop.permute.xlu0 %287
    %v289 = vstv %s286
    %v290 = vmul.f32 %v289, %v288
    %v291 = vadd.f32 %v285, %v290
    %s292 = sld [smem:[#allocation8 + $0x17]]
    %293 = vrot.lane.b32.xlu0 %v274, 3
    %v294 = vpop.permute.xlu0 %293
    %v295 = vstv %s292
    %v296 = vmul.f32 %v295, %v294
    %v297 = vadd.f32 %v291, %v296
    %s298 = sld [smem:[#allocation8 + $0x18]]
    %299 = vrot.lane.b32.xlu0 %v274, 2
    %v300 = vpop.permute.xlu0 %299
    %v301 = vstv %s298
    %v302 = vmul.f32 %v301, %v300
    %v303 = vadd.f32 %v297, %v302
    %s304 = sld [smem:[#allocation8 + $0x19]]
    %305 = vrot.lane.b32.xlu0 %v274, 1
    %v306 = vpop.permute.xlu0 %305
    %v307 = vstv %s304
    %v308 = vmul.f32 %v307, %v306
    %v309 = vadd.f32 %v303, %v308
    %s310 = sld [smem:[#allocation8 + $0x1a]]
    %v311 = vstv %s310
    %v312 = vmul.f32 %v311, %v274
    %v313 = vadd.f32 %v309, %v312
    %s314 = sld [smem:[#allocation8 + $0x1b]]
    %315 = vrot.lane.b32.xlu0 %v274, 127
    %v316 = vpop.permute.xlu0 %315
    %v317 = vstv %s314
    %v318 = vmul.f32 %v317, %v316
    %v319 = vadd.f32 %v313, %v318
    %s320 = sld [smem:[#allocation8 + $0x1c]]
    %321 = vrot.lane.b32.xlu0 %v274, 126
    %v322 = vpop.permute.xlu0 %321
    %v323 = vstv %s320
    %v324 = vmul.f32 %v323, %v322
    %v325 = vadd.f32 %v319, %v324
    %s326 = sld [smem:[#allocation8 + $0x1d]]
    %327 = vrot.lane.b32.xlu0 %v274, 125
    %v328 = vpop.permute.xlu0 %327
    %v329 = vstv %s326
    %v330 = vmul.f32 %v329, %v328
    %v331 = vadd.f32 %v325, %v330
    %s332 = sld [smem:[#allocation8 + $0x1e]]
    %333 = vrot.lane.b32.xlu0 %v62, 4
    %v334 = vpop.permute.xlu0 %333
    %v335 = vstv %s332
    %v336 = vmul.f32 %v335, %v334
    %s337 = sld [smem:[#allocation8 + $0x1f]]
    %338 = vrot.lane.b32.xlu0 %v62, 3
    %v339 = vpop.permute.xlu0 %338
    %v340 = vstv %s337
    %v341 = vmul.f32 %v340, %v339
    %v342 = vadd.f32 %v336, %v341
    %s343 = sld [smem:[#allocation8 + $0x20]]
    %344 = vrot.lane.b32.xlu0 %v62, 2
    %v345 = vpop.permute.xlu0 %344
    %v346 = vstv %s343
    %v347 = vmul.f32 %v346, %v345
    %v348 = vadd.f32 %v342, %v347
    %s349 = sld [smem:[#allocation8 + $0x21]]
    %350 = vrot.lane.b32.xlu0 %v62, 1
    %v351 = vpop.permute.xlu0 %350
    %v352 = vstv %s349
    %v353 = vmul.f32 %v352, %v351
    %v354 = vadd.f32 %v348, %v353
    %s355 = sld [smem:[#allocation8 + $0x22]]
    %v356 = vstv %s355
    %v357 = vmul.f32 %v356, %v62
    %v358 = vadd.f32 %v354, %v357
    %s359 = sld [smem:[#allocation8 + $0x23]]
    %360 = vrot.lane.b32.xlu0 %v62, 127
    %v361 = vpop.permute.xlu0 %360
    %v362 = vstv %s359
    %v363 = vmul.f32 %v362, %v361
    %v364 = vadd.f32 %v358, %v363
    %s365 = sld [smem:[#allocation8 + $0x24]]
    %366 = vrot.lane.b32.xlu0 %v62, 126
    %v367 = vpop.permute.xlu0 %366
    %v368 = vstv %s365
    %v369 = vmul.f32 %v368, %v367
    %v370 = vadd.f32 %v364, %v369
    %s371 = sld [smem:[#allocation8 + $0x25]]
    %372 = vrot.lane.b32.xlu0 %v62, 125
    %v373 = vpop.permute.xlu0 %372
    %v374 = vstv %s371
    %v375 = vmul.f32 %v374, %v373
    %v376 = vadd.f32 %v370, %v375
    %s377 = sld [smem:[#allocation8 + $0x26]]
    %378 = vrot.lane.b32.xlu0 %v62, 124
    %v379 = vpop.permute.xlu0 %378
    %v380 = vstv %s377
    %v381 = vmul.f32 %v380, %v379
    %v382 = vadd.f32 %v376, %v381
    %s383 = sld [smem:[#allocation8 + $0x27]]
    %384 = vrot.lane.b32.xlu0 %v62, 123
    %v385 = vpop.permute.xlu0 %384
    %v386 = vstv %s383
    %v387 = vmul.f32 %v386, %v385
    %v388 = vadd.f32 %v382, %v387
    %v389 = vadd.f32 %v331, %v388
    %vm390 = vcmp.lt.s32.totalorder %v57, 83
    %vm391 = vmand %vm60, %vm390
    %v392 = vsel %vm391, %v389, 0.0
    %393 = vadd.xlane.f32.xlu0 %v392
    %v394 = vpop.xlane.xlu0 %393
    %v395 = vrot.slane %v394, 4
    %v396 = vadd.f32 %v394, %v395
    %v397 = vrot.slane %v396, 2
    %v398 = vadd.f32 %v396, %v397
    %v399 = vrot.slane %v398, 1
    %v400 = vadd.f32 %v398, %v399
    %s401 = vtos %v400
    %v402 = vstv %s401
    %v403 = vmul.f32 %v392, %v392
    %404 = vadd.xlane.f32.xlu0 %v403
    %v405 = vpop.xlane.xlu0 %404
    %v406 = vrot.slane %v405, 4
    %v407 = vadd.f32 %v405, %v406
    %v408 = vrot.slane %v407, 2
    %v409 = vadd.f32 %v407, %v408
    %v410 = vrot.slane %v409, 1
    %v411 = vadd.f32 %v409, %v410
    %s412 = vtos %v411
    %v413 = vstv %s412
    %v414 = vmul.f32 %v402, 0.006024096
    %v415 = vmul.f32 %v413, 0.006024096
    %v416 = vmul.f32 %v414, %v414
    %v417 = vsub.f32 %v415, %v416
    %v418 = vadd.f32 %v417, 1e-05
    %v419 = vrsqrt.pop %v418
    %v420 = vmul.f32 %v419, %v418
    %v421 = vmul.f32 %v420, %v419
    %v422 = vmul.f32 0.5, %v421
    %v423 = vsub.f32 1.5, %v422
    %v424 = vmul.f32 %v419, %v423
    %vm425 = vweird.f32 %v418
    %vm426 = vweird.f32 %v419
    %vm427 = vmor %vm425, %vm426
    %v428 = vsel %vm427, %v419, %v424
    %s429 = sld [smem:[#allocation8 + $0x36]]
    %v430 = vstv %s429
    %v431 = vmul.f32 %v428, %v430
    %s432 = sld [smem:[#allocation8 + $0x37]]
    %v433 = vmul.f32 %v414, %v431
    %v434 = vstv %s432
    %v435 = vsub.f32 %v434, %v433
    %v436 = vmul.f32 %v392, %v431
    %v437 = vadd.f32 %v436, %v435
    %v438 = vsel %vm391, %v437, 0.0
    %s439 = sld [smem:[#allocation8 + $0x28]]
    %440 = vrot.lane.b32.xlu0 %v438, 5
    %v441 = vpop.permute.xlu0 %440
    %v442 = vstv %s439
    %v443 = vmul.f32 %v442, %v441
    %s444 = sld [smem:[#allocation8 + $0x29]]
    %445 = vrot.lane.b32.xlu0 %v438, 4
    %v446 = vpop.permute.xlu0 %445
    %v447 = vstv %s444
    %v448 = vmul.f32 %v447, %v446
    %v449 = vadd.f32 %v443, %v448
    %s450 = sld [smem:[#allocation8 + $0x2a]]
    %451 = vrot.lane.b32.xlu0 %v438, 3
    %v452 = vpop.permute.xlu0 %451
    %v453 = vstv %s450
    %v454 = vmul.f32 %v453, %v452
    %v455 = vadd.f32 %v449, %v454
    %s456 = sld [smem:[#allocation8 + $0x2b]]
    %457 = vrot.lane.b32.xlu0 %v438, 2
    %v458 = vpop.permute.xlu0 %457
    %v459 = vstv %s456
    %v460 = vmul.f32 %v459, %v458
    %v461 = vadd.f32 %v455, %v460
    %s462 = sld [smem:[#allocation8 + $0x2c]]
    %463 = vrot.lane.b32.xlu0 %v438, 1
    %v464 = vpop.permute.xlu0 %463
    %v465 = vstv %s462
    %v466 = vmul.f32 %v465, %v464
    %v467 = vadd.f32 %v461, %v466
    %s468 = sld [smem:[#allocation8 + $0x2d]]
    %v469 = vstv %s468
    %v470 = vmul.f32 %v469, %v438
    %v471 = vadd.f32 %v467, %v470
    %s472 = sld [smem:[#allocation8 + $0x2e]]
    %473 = vrot.lane.b32.xlu0 %v438, 127
    %v474 = vpop.permute.xlu0 %473
    %v475 = vstv %s472
    %v476 = vmul.f32 %v475, %v474
    %v477 = vadd.f32 %v471, %v476
    %s478 = sld [smem:[#allocation8 + $0x2f]]
    %479 = vrot.lane.b32.xlu0 %v438, 126
    %v480 = vpop.permute.xlu0 %479
    %v481 = vstv %s478
    %v482 = vmul.f32 %v481, %v480
    %v483 = vadd.f32 %v477, %v482
    %s484 = sld [smem:[#allocation8 + $0x30]]
    %485 = vrot.lane.b32.xlu0 %v438, 125
    %v486 = vpop.permute.xlu0 %485
    %v487 = vstv %s484
    %v488 = vmul.f32 %v487, %v486
    %v489 = vadd.f32 %v483, %v488
    %s490 = sld [smem:[#allocation8 + $0x31]]
    %491 = vrot.lane.b32.xlu0 %v438, 124
    %v492 = vpop.permute.xlu0 %491
    %v493 = vstv %s490
    %v494 = vmul.f32 %v493, %v492
    %v495 = vadd.f32 %v489, %v494
    %vm496 = vcmp.lt.s32.totalorder %v57, 84
    %vm497 = vmand %vm60, %vm496
    %v498 = vsel %vm497, %v495, 0.0
    %499 = vadd.xlane.f32.xlu0 %v498
    %v500 = vpop.xlane.xlu0 %499
    %v501 = vrot.slane %v500, 4
    %v502 = vadd.f32 %v500, %v501
    %v503 = vrot.slane %v502, 2
    %v504 = vadd.f32 %v502, %v503
    %v505 = vrot.slane %v504, 1
    %v506 = vadd.f32 %v504, %v505
    %s507 = vtos %v506
    %v508 = vstv %s507
    %v509 = vmul.f32 %v498, %v498
    %510 = vadd.xlane.f32.xlu0 %v509
    %v511 = vpop.xlane.xlu0 %510
    %v512 = vrot.slane %v511, 4
    %v513 = vadd.f32 %v511, %v512
    %v514 = vrot.slane %v513, 2
    %v515 = vadd.f32 %v513, %v514
    %v516 = vrot.slane %v515, 1
    %v517 = vadd.f32 %v515, %v516
    %s518 = vtos %v517
    %v519 = vstv %s518
    %v520 = vmul.f32 %v508, 0.005952381
    %v521 = vmul.f32 %v519, 0.005952381
    %v522 = vmul.f32 %v520, %v520
    %v523 = vsub.f32 %v521, %v522
    %v524 = vadd.f32 %v523, 1e-05
    %v525 = vrsqrt.pop %v524
    %v526 = vmul.f32 %v525, %v524
    %v527 = vmul.f32 %v526, %v525
    %v528 = vmul.f32 0.5, %v527
    %v529 = vsub.f32 1.5, %v528
    %v530 = vmul.f32 %v525, %v529
    %vm531 = vweird.f32 %v524
    %vm532 = vweird.f32 %v525
    %vm533 = vmor %vm531, %vm532
    %v534 = vsel %vm533, %v525, %v530
    %s535 = sld [smem:[#allocation8 + $0x38]]
    %v536 = vstv %s535
    %v537 = vmul.f32 %v534, %v536
    %s538 = sld [smem:[#allocation8 + $0x39]]
    %v539 = vmul.f32 %v520, %v537
    %v540 = vstv %s538
    %v541 = vsub.f32 %v540, %v539
    %v542 = vmul.f32 %v498, %v537
    %v543 = vadd.f32 %v542, %v541
    %v544 = vsel %vm497, %v543, 0.0
    %545 = vst [vmem:[#allocation9] sm:$0xff] %v544
    // Predicated region
    $region26: #{tpu_custom_call.1} parent=1 // pred_check
      _
    $region27: #{tpu_custom_call.1} parent=1 // pred_check_branch
      %547 = sbr.rel (0) target = $region29
    $region28: #{tpu_custom_call.1} parent=1 // pred_region
      %549 = vsyncadd [#allocation4], 0
      %s551 = sshll.u32 [#allocation9], 4
      %s552 = int_to_ptr.vmem [resolvable:$true] %s551
      %s553 = sshll.u32 %s3, 4
      %s554 = int_to_ptr.hbm [resolvable:$true] %s553
      %556 = dma.vmem_to_hbm [thread:$0]  %s552, 128, %s554, [#allocation4]
    $region29: #{tpu_custom_call.1} parent=1 // pred_fallthru
      _
    // Predicated region
    $region30: #{tpu_custom_call.1} parent=1 // pred_check
      _
    $region31: #{tpu_custom_call.1} parent=1 // pred_check_branch
      %558 = sbr.rel (0) target = $region33
    $region32: #{tpu_custom_call.1} parent=1 // pred_region
      %560 = dma.done [#allocation4], 128
    $region33: #{tpu_custom_call.1} parent=1 // pred_fallthru
      _
    %561 = vsyncpa [#allocation3], 1
    %562 = vsyncpa [#allocation7], 1
    %563 = vsyncpa [#allocation4], 1
    %564 = vsyncpa [#allocation5], 1

</llo_original>
